<compile_context>
chip_gen: v5e
topology: v5e:2x2
jax: 0.10.0
libtpu: 0.0.40
codegen_flags: <defaults>
</compile_context>

<pallas_src>
import functools

import jax
import jax.numpy as jnp
from jax import lax
from jax.experimental import pallas as pl
from jax.experimental.pallas import tpu as pltpu


def _stats_kernel(x_ref, sum_ref, sq_ref, acc_s_ref, acc_q_ref,
                  *, col_tile, total_cols, mask_cols):
    """Per-row sum / sum-of-squares, accumulated per-lane across lane tiles."""
    j = pl.program_id(1)

    @pl.when(j == 0)
    def _():
        acc_s_ref[...] = jnp.zeros_like(acc_s_ref)
        acc_q_ref[...] = jnp.zeros_like(acc_q_ref)

    x = x_ref[...].astype(jnp.float32)                     # (tr, tl)
    if mask_cols:
        # Only traced when L % tl != 0: zero the out-of-bounds lane tail so the
        # stale data in the padded block doesn't corrupt the sums.
        col = lax.broadcasted_iota(jnp.int32, x.shape, 1) + j * col_tile
        x = jnp.where(col < total_cols, x, 0.0)

    # Pure VPU per-lane accumulation; no per-tile cross-lane reduce.
    acc_s_ref[...] += x
    acc_q_ref[...] += x * x

    @pl.when(j == pl.num_programs(1) - 1)
    def _():
        # Single cross-lane (XLU) reduce per row block, done once.
        sum_ref[...] = jnp.sum(acc_s_ref[...], axis=1, keepdims=True)
        sq_ref[...] = jnp.sum(acc_q_ref[...], axis=1, keepdims=True)


def _normalize_kernel(x_ref, scale_ref, shift_ref, o_ref):
    """Streaming elementwise pass: y = x * scale + shift (per row)."""
    x = x_ref[...].astype(jnp.float32)                     # (tr, tl)
    o_ref[...] = (x * scale_ref[...] + shift_ref[...]).astype(o_ref.dtype)


def _pick_tiles(R, L, budget_elems=2 * 1024 * 1024):
    """Pick (row_tile, lane_tile) targeting ~8 MiB of f32 elements per tile."""
    # Lane tile: multiple of 128 (or the full L when L < 128).  Capped so a
    # minimal 8-row block still fits the element budget.
    if L <= 128:
        tl = L
    else:
        lane_cap = max(128, ((budget_elems // 8) // 128) * 128)
        tl = min((L // 128) * 128, lane_cap)
    # Row tile: multiple of 8 (or the full R when R < 8), sized from the budget.
    if R <= 8:
        tr = R
    else:
        tr_cap = max(8, (budget_elems // tl // 8) * 8)
        if R % 8 == 0:
            tr = min(R, tr_cap)
        else:
            tr = min((R // 8) * 8, tr_cap)
    return tr, tl


def _batch_norm_impl(x, weight, bias, eps):
    N, C, L = x.shape
    R = N * C
    x2 = x.reshape(R, L)                                   # free row-major view

    tr, tl = _pick_tiles(R, L)
    grid = (pl.cdiv(R, tr), pl.cdiv(L, tl))
    vmem_limit = 48 * 1024 * 1024                          # fits v7x' 64 MiB/TC

    x_spec = pl.BlockSpec((tr, tl), lambda i, j: (i, j))
    row_spec = pl.BlockSpec((tr, 1), lambda i, j: (i, 0))

    # ---- pass 1: per-row sum / sum-of-squares ------------------------------
    stats_kernel = functools.partial(
        _stats_kernel, col_tile=tl, total_cols=L, mask_cols=(L % tl != 0))
    row_sum, row_sq = pl.pallas_call(
        stats_kernel,
        grid=grid,
        in_specs=[x_spec],
        out_specs=(row_spec, row_spec),
        out_shape=(jax.ShapeDtypeStruct((R, 1), jnp.float32),
                   jax.ShapeDtypeStruct((R, 1), jnp.float32)),
        scratch_shapes=[pltpu.VMEM((tr, tl), jnp.float32),
                        pltpu.VMEM((tr, tl), jnp.float32)],
        compiler_params=pltpu.CompilerParams(
            dimension_semantics=("parallel", "arbitrary"),
            vmem_limit_bytes=vmem_limit),
    )(x2)

    # ---- tiny per-channel math (C elements), once, outside the tiled loops --
    count = jnp.float32(N * L)
    sums_c = row_sum.reshape(N, C).sum(axis=0)
    sqs_c = row_sq.reshape(N, C).sum(axis=0)
    mean_c = sums_c / count
    var_c = jnp.maximum(sqs_c / count - mean_c * mean_c, 0.0)   # biased var
    inv_std_c = lax.rsqrt(var_c + jnp.float32(eps))
    scale_c = weight.astype(jnp.float32) * inv_std_c
    shift_c = bias.astype(jnp.float32) - mean_c * scale_c

    # Per-row folded scale/shift (broadcast channel params over the batch dim).
    scale_r = jnp.broadcast_to(scale_c[None, :], (N, C)).reshape(R, 1)
    shift_r = jnp.broadcast_to(shift_c[None, :], (N, C)).reshape(R, 1)

    # ---- pass 2: streaming normalize y = x * scale + shift ------------------
    out2 = pl.pallas_call(
        _normalize_kernel,
        grid=grid,
        in_specs=[x_spec, row_spec, row_spec],
        out_specs=x_spec,
        out_shape=jax.ShapeDtypeStruct((R, L), x.dtype),
        compiler_params=pltpu.CompilerParams(
            dimension_semantics=("parallel", "parallel"),
            vmem_limit_bytes=vmem_limit),
    )(x2, scale_r, shift_r)

    return out2.reshape(N, C, L)


def batch_norm_1d(x, weight, bias, eps=1e-5):
    """nn.BatchNorm1d forward (training-mode batch stats). x: (N, C, L) or (N, C)."""
    if x.ndim == 2:
        return _batch_norm_impl(x[:, :, None], weight, bias, eps)[:, :, 0]
    return _batch_norm_impl(x, weight, bias, eps)


if __name__ == "__main__":
    key = jax.random.PRNGKey(0)
    N, C, L = 8, 4, 16                      # num_features = C = 4
    x = jax.random.normal(key, (N, C, L), dtype=jnp.float32)

    # nn.BatchNorm1d(num_features) default init: weight = 1, bias = 0.
    weight = jnp.ones((C,), dtype=jnp.float32)
    bias = jnp.zeros((C,), dtype=jnp.float32)

    y = jax.block_until_ready(batch_norm_1d(x, weight, bias))

    # Silent correctness check against a plain-JAX reference.
    mean = jnp.mean(x, axis=(0, 2), keepdims=True)
    var = jnp.mean((x - mean) ** 2, axis=(0, 2), keepdims=True)
    ref = (x - mean) / jnp.sqrt(var + 1e-5) * weight[None, :, None] + bias[None, :, None]
    assert y.shape == x.shape and y.dtype == x.dtype
    assert jnp.allclose(y, ref, atol=1e-4, rtol=1e-4)

    print("KERNEL_OK")
</pallas_src>

<mosaic_0001>
module attributes {stable_mosaic.version = 11 : i64} {
  func.func @_stats_kernel(%arg0: i32, %arg1: i32, %arg2: memref<32x16xf32, #tpu.memory_space<vmem>>, %arg3: memref<32x1xf32, #tpu.memory_space<vmem>>, %arg4: memref<32x1xf32, #tpu.memory_space<vmem>>, %arg5: memref<32x16xf32, #tpu.memory_space<vmem>>, %arg6: memref<32x16xf32, #tpu.memory_space<vmem>>) attributes {dimension_semantics = [#tpu.dimension_semantics<parallel>, #tpu.dimension_semantics<arbitrary>], iteration_bounds = array<i64: 1, 1>, scalar_prefetch = 0 : i64, scratch_operands = 2 : i64, tpu.core_type = #tpu.core_type<tc>, window_params = [{transform_indices = @transform_0, window_bounds = array<i64: 32, 16>}, {transform_indices = @transform_1, window_bounds = array<i64: 32, 1>}, {transform_indices = @transform_2, window_bounds = array<i64: 32, 1>}]} {
    %c0_i32 = arith.constant 0 : i32
    %0 = arith.cmpi eq, %arg1, %c0_i32 : i32
    %1 = arith.extui %0 : i1 to i32
    %c0_i32_0 = arith.constant 0 : i32
    %2 = arith.cmpi ne, %1, %c0_i32_0 : i32
    scf.if %2 {
      %cst = arith.constant 0.000000e+00 : f32
      %14 = vector.broadcast %cst : f32 to vector<32x16xf32>
      %c0_12 = arith.constant 0 : index
      %c0_13 = arith.constant 0 : index
      %15 = vector.load %arg5[%c0_12, %c0_13] : memref<32x16xf32, #tpu.memory_space<vmem>>, vector<32x16xf32>
      tpu.vector_store %arg5[%c0_12, %c0_13], %14 {strides = array<i32>} : memref<32x16xf32, #tpu.memory_space<vmem>>, vector<32x16xf32>,
      %cst_14 = arith.constant 0.000000e+00 : f32
      %16 = vector.broadcast %cst_14 : f32 to vector<32x16xf32>
      %c0_15 = arith.constant 0 : index
      %c0_16 = arith.constant 0 : index
      %17 = vector.load %arg6[%c0_15, %c0_16] : memref<32x16xf32, #tpu.memory_space<vmem>>, vector<32x16xf32>
      tpu.vector_store %arg6[%c0_15, %c0_16], %16 {strides = array<i32>} : memref<32x16xf32, #tpu.memory_space<vmem>>, vector<32x16xf32>,
    } else {
    }
    %c0 = arith.constant 0 : index
    %c0_1 = arith.constant 0 : index
    %3 = vector.load %arg2[%c0, %c0_1] : memref<32x16xf32, #tpu.memory_space<vmem>>, vector<32x16xf32>
    %c0_2 = arith.constant 0 : index
    %c0_3 = arith.constant 0 : index
    %4 = vector.load %arg5[%c0_2, %c0_3] : memref<32x16xf32, #tpu.memory_space<vmem>>, vector<32x16xf32>
    %5 = arith.addf %4, %3 : vector<32x16xf32>
    %c0_4 = arith.constant 0 : index
    %c0_5 = arith.constant 0 : index
    %6 = vector.load %arg5[%c0_4, %c0_5] : memref<32x16xf32, #tpu.memory_space<vmem>>, vector<32x16xf32>
    tpu.vector_store %arg5[%c0_4, %c0_5], %5 {strides = array<i32>} : memref<32x16xf32, #tpu.memory_space<vmem>>, vector<32x16xf32>,
    %c0_6 = arith.constant 0 : index
    %c0_7 = arith.constant 0 : index
    %7 = vector.load %arg6[%c0_6, %c0_7] : memref<32x16xf32, #tpu.memory_space<vmem>>, vector<32x16xf32>
    %8 = arith.mulf %3, %3 : vector<32x16xf32>
    %9 = arith.addf %7, %8 : vector<32x16xf32>
    %c0_8 = arith.constant 0 : index
    %c0_9 = arith.constant 0 : index
    %10 = vector.load %arg6[%c0_8, %c0_9] : memref<32x16xf32, #tpu.memory_space<vmem>>, vector<32x16xf32>
    tpu.vector_store %arg6[%c0_8, %c0_9], %9 {strides = array<i32>} : memref<32x16xf32, #tpu.memory_space<vmem>>, vector<32x16xf32>,
    %c0_i32_10 = arith.constant 0 : i32
    %11 = arith.cmpi eq, %arg1, %c0_i32_10 : i32
    %12 = arith.extui %11 : i1 to i32
    %c0_i32_11 = arith.constant 0 : i32
    %13 = arith.cmpi ne, %12, %c0_i32_11 : i32
    scf.if %13 {
      %c0_12 = arith.constant 0 : index
      %c0_13 = arith.constant 0 : index
      %14 = vector.load %arg5[%c0_12, %c0_13] : memref<32x16xf32, #tpu.memory_space<vmem>>, vector<32x16xf32>
      %cst = arith.constant dense<0.000000e+00> : vector<32xf32>
      %15 = vector.multi_reduction <add>, %14, %cst [1] : vector<32x16xf32> to vector<32xf32>
      %16 = vector.shape_cast %15 : vector<32xf32> to vector<32x1xf32>
      %c0_14 = arith.constant 0 : index
      %c0_15 = arith.constant 0 : index
      %17 = vector.load %arg3[%c0_14, %c0_15] : memref<32x1xf32, #tpu.memory_space<vmem>>, vector<32x1xf32>
      tpu.vector_store %arg3[%c0_14, %c0_15], %16 {strides = array<i32>} : memref<32x1xf32, #tpu.memory_space<vmem>>, vector<32x1xf32>,
      %c0_16 = arith.constant 0 : index
      %c0_17 = arith.constant 0 : index
      %18 = vector.load %arg6[%c0_16, %c0_17] : memref<32x16xf32, #tpu.memory_space<vmem>>, vector<32x16xf32>
      %cst_18 = arith.constant dense<0.000000e+00> : vector<32xf32>
      %19 = vector.multi_reduction <add>, %18, %cst_18 [1] : vector<32x16xf32> to vector<32xf32>
      %20 = vector.shape_cast %19 : vector<32xf32> to vector<32x1xf32>
      %c0_19 = arith.constant 0 : index
      %c0_20 = arith.constant 0 : index
      %21 = vector.load %arg4[%c0_19, %c0_20] : memref<32x1xf32, #tpu.memory_space<vmem>>, vector<32x1xf32>
      tpu.vector_store %arg4[%c0_19, %c0_20], %20 {strides = array<i32>} : memref<32x1xf32, #tpu.memory_space<vmem>>, vector<32x1xf32>,
    } else {
    }
    return
  }
  func.func @transform_0(%arg0: i32, %arg1: i32) -> (i32, i32) {
    %c0_i32 = arith.constant 0 : i32
    return %arg0, %arg1 : i32, i32
  }
  func.func @transform_1(%arg0: i32, %arg1: i32) -> (i32, i32) {
    %c0_i32 = arith.constant 0 : i32
    %c0_i32_0 = arith.constant 0 : i32
    return %arg0, %c0_i32 : i32, i32
  }
  func.func @transform_2(%arg0: i32, %arg1: i32) -> (i32, i32) {
    %c0_i32 = arith.constant 0 : i32
    %c0_i32_0 = arith.constant 0 : i32
    return %arg0, %c0_i32 : i32, i32
  }
}

</mosaic_0001>

<llo_original>
// kernel: tpu_custom_call.1
$region0: #{tpu_custom_call.1}
  #allocation0 [shape = 'u32[]', space=smem, size = 0x4, offset = 0x4, fixed_abs, tag = 'smem constant byte address 0x4 - core index']
  #allocation1 [shape = 'u32[72,128]{1,0:T(1,128)}', space=vmem, size = 0x9000, scoped, tag = 'internal scratch']
  #allocation2 [shape = 'f32[32,16]{1,0:T(8,128)}', space=vmem, size = 0x4000, scoped, tag = 'scratch operand']
  #allocation3 [shape = 'f32[32,16]{1,0:T(8,128)}', space=vmem, size = 0x4000, scoped, tag = 'scratch operand']
  %s0 = inlined_call_operand.vmem [shape: f32[32,16], index: 0, kind: input, shape index: {}]
  %s1 = inlined_call_operand.vmem [shape: f32[32,1], index: 1, kind: output, shape index: {0}]
  %s2 = inlined_call_operand.vmem [shape: f32[32,1], index: 2, kind: output, shape index: {1}]
  %3 = xla_tuple %s1, %s2
  %s4 = sld [smem:[#allocation0]]
  $region30: #{tpu_custom_call.1} parent=0
    _
  %s6 = ssub.s32 1, %s4
  %s7 = scalar_select 0, %s6, %s4
  // Predicated region
  $region2: #{tpu_custom_call.1} parent=0 // pred_check
    _
  $region3: #{tpu_custom_call.1} parent=0 // pred_check_branch
    %9 = sbr.rel (0) target = $region5
  $region4: #{tpu_custom_call.1} parent=0 // pred_region
    _
  $region5: #{tpu_custom_call.1} parent=0 // pred_fallthru
    _
  %p10 = scmp.eq.s32.totalorder 0, 0
  // Predicated region
  $region6: #{tpu_custom_call.1} parent=0 // pred_check
    %p11 = pneg %p10
  $region7: #{tpu_custom_call.1} parent=0 // pred_check_branch
    %13 = sbr.rel (%p11) target = $region9
  $region8: #{tpu_custom_call.1} parent=0 // pred_region
    %vm14 = vcmask 130048
    %15 = vst.msk [vmem:[#allocation2] sm:$0xff] %vm14, 0.0
    %16 = vst.msk [vmem:[#allocation2 + $0x8] sm:$0xff] %vm14, 0.0
    %17 = vst.msk [vmem:[#allocation2 + $0x10] sm:$0xff] %vm14, 0.0
    %18 = vst.msk [vmem:[#allocation2 + $0x18] sm:$0xff] %vm14, 0.0
    %19 = vst.msk [vmem:[#allocation3] sm:$0xff] %vm14, 0.0
    %20 = vst.msk [vmem:[#allocation3 + $0x8] sm:$0xff] %vm14, 0.0
    %21 = vst.msk [vmem:[#allocation3 + $0x10] sm:$0xff] %vm14, 0.0
    %22 = vst.msk [vmem:[#allocation3 + $0x18] sm:$0xff] %vm14, 0.0
  $region9: #{tpu_custom_call.1} parent=0 // pred_fallthru
    _
  %v23 = vld [vmem:[%s0] sm:$0xff]
  %v24 = vld [vmem:[%s0 + $0x8] sm:$0xff]
  %v25 = vld [vmem:[%s0 + $0x10] sm:$0xff]
  %v26 = vld [vmem:[%s0 + $0x18] sm:$0xff]
  %v27 = vld [vmem:[#allocation2] sm:$0xff]
  %v28 = vld [vmem:[#allocation2 + $0x8] sm:$0xff]
  %v29 = vld [vmem:[#allocation2 + $0x10] sm:$0xff]
  %v30 = vld [vmem:[#allocation2 + $0x18] sm:$0xff]
  %v31 = vadd.f32 %v27, %v23
  %v32 = vadd.f32 %v28, %v24
  %v33 = vadd.f32 %v29, %v25
  %v34 = vadd.f32 %v30, %v26
  %vm35 = vcmask 130048
  %36 = vst.msk [vmem:[#allocation2] sm:$0xff] %vm35, %v31
  %37 = vst.msk [vmem:[#allocation2 + $0x8] sm:$0xff] %vm35, %v32
  %38 = vst.msk [vmem:[#allocation2 + $0x10] sm:$0xff] %vm35, %v33
  %39 = vst.msk [vmem:[#allocation2 + $0x18] sm:$0xff] %vm35, %v34
  %v40 = vld [vmem:[#allocation3] sm:$0xff]
  %v41 = vld [vmem:[#allocation3 + $0x8] sm:$0xff]
  %v42 = vld [vmem:[#allocation3 + $0x10] sm:$0xff]
  %v43 = vld [vmem:[#allocation3 + $0x18] sm:$0xff]
  %v44 = vmul.f32 %v23, %v23
  %v45 = vmul.f32 %v24, %v24
  %v46 = vmul.f32 %v25, %v25
  %v47 = vmul.f32 %v26, %v26
  %v48 = vadd.f32 %v40, %v44
  %v49 = vadd.f32 %v41, %v45
  %v50 = vadd.f32 %v42, %v46
  %v51 = vadd.f32 %v43, %v47
  %52 = vst.msk [vmem:[#allocation3] sm:$0xff] %vm35, %v48
  %53 = vst.msk [vmem:[#allocation3 + $0x8] sm:$0xff] %vm35, %v49
  %54 = vst.msk [vmem:[#allocation3 + $0x10] sm:$0xff] %vm35, %v50
  %55 = vst.msk [vmem:[#allocation3 + $0x18] sm:$0xff] %vm35, %v51
  // Predicated region
  $region10: #{tpu_custom_call.1} parent=0 // pred_check
    %p56 = pneg %p10
  $region11: #{tpu_custom_call.1} parent=0 // pred_check_branch
    %58 = sbr.rel (%p56) target = $region13
  $region12: #{tpu_custom_call.1} parent=0 // pred_region
    %v59 = vld [vmem:[#allocation2] sm:$0xff]
    %v60 = vld [vmem:[#allocation2 + $0x8] sm:$0xff]
    %v61 = vld [vmem:[#allocation2 + $0x10] sm:$0xff]
    %v62 = vld [vmem:[#allocation2 + $0x18] sm:$0xff]
    %v63 = vsel %vm35, %v59, 0.0
    %64 = vadd.xlane.f32.xlu0 %v63
    %v65 = vpop.xlane.xlu0 %64
    %v66 = vsel %vm35, %v60, 0.0
    %67 = vadd.xlane.f32.xlu0 %v66
    %v68 = vpop.xlane.xlu0 %67
    %v69 = vsel %vm35, %v61, 0.0
    %70 = vadd.xlane.f32.xlu0 %v69
    %v71 = vpop.xlane.xlu0 %70
    %v72 = vsel %vm35, %v62, 0.0
    %73 = vadd.xlane.f32.xlu0 %v72
    %v74 = vpop.xlane.xlu0 %73
    %vm75 = vcmask 7168
    %76 = vst.msk [vmem:[%s1] sm:$0xff] %vm75, %v65
    %77 = vst.msk [vmem:[%s1 + $0x8] sm:$0xff] %vm75, %v68
    %78 = vst.msk [vmem:[%s1 + $0x10] sm:$0xff] %vm75, %v71
    %79 = vst.msk [vmem:[%s1 + $0x18] sm:$0xff] %vm75, %v74
    %v80 = vld [vmem:[#allocation3] sm:$0xff]
    %v81 = vld [vmem:[#allocation3 + $0x8] sm:$0xff]
    %v82 = vld [vmem:[#allocation3 + $0x10] sm:$0xff]
    %v83 = vld [vmem:[#allocation3 + $0x18] sm:$0xff]
    %v84 = vsel %vm35, %v80, 0.0
    %85 = vadd.xlane.f32.xlu0 %v84
    %v86 = vpop.xlane.xlu0 %85
    %v87 = vsel %vm35, %v81, 0.0
    %88 = vadd.xlane.f32.xlu0 %v87
    %v89 = vpop.xlane.xlu0 %88
    %v90 = vsel %vm35, %v82, 0.0
    %91 = vadd.xlane.f32.xlu0 %v90
    %v92 = vpop.xlane.xlu0 %91
    %v93 = vsel %vm35, %v83, 0.0
    %94 = vadd.xlane.f32.xlu0 %v93
    %v95 = vpop.xlane.xlu0 %94
    %96 = vst.msk [vmem:[%s2] sm:$0xff] %vm75, %v86
    %97 = vst.msk [vmem:[%s2 + $0x8] sm:$0xff] %vm75, %v89
    %98 = vst.msk [vmem:[%s2 + $0x10] sm:$0xff] %vm75, %v92
    %99 = vst.msk [vmem:[%s2 + $0x18] sm:$0xff] %vm75, %v95
  $region13: #{tpu_custom_call.1} parent=0 // pred_fallthru
    _
  // Predicated region
  $region14: #{tpu_custom_call.1} parent=0 // pred_check
    _
  $region15: #{tpu_custom_call.1} parent=0 // pred_check_branch
    %101 = sbr.rel (0) target = $region17
  $region16: #{tpu_custom_call.1} parent=0 // pred_region
    _
  $region17: #{tpu_custom_call.1} parent=0 // pred_fallthru
    _
  // Predicated region
  $region18: #{tpu_custom_call.1} parent=0 // pred_check
    _
  $region19: #{tpu_custom_call.1} parent=0 // pred_check_branch
    %103 = sbr.rel (0) target = $region21
  $region20: #{tpu_custom_call.1} parent=0 // pred_region
    _
  $region21: #{tpu_custom_call.1} parent=0 // pred_fallthru
    _
  // Predicated region
  $region22: #{tpu_custom_call.1} parent=0 // pred_check
    _
  $region23: #{tpu_custom_call.1} parent=0 // pred_check_branch
    %105 = sbr.rel (0) target = $region25
  $region24: #{tpu_custom_call.1} parent=0 // pred_region
    _
  $region25: #{tpu_custom_call.1} parent=0 // pred_fallthru
    _
  // Predicated region
  $region26: #{tpu_custom_call.1} parent=0 // pred_check
    _
  $region27: #{tpu_custom_call.1} parent=0 // pred_check_branch
    %107 = sbr.rel (0) target = $region29
  $region28: #{tpu_custom_call.1} parent=0 // pred_region
    _
  $region29: #{tpu_custom_call.1} parent=0 // pred_fallthru
    _

</llo_original>
